<compile_context>
chip_gen: v6e
topology: v6e:2x2x1
jax: 0.10.0
libtpu: 0.0.40
codegen_flags: <defaults>
</compile_context>

<pallas_src>
import jax
import jax.numpy as jnp
from jax import lax
from jax.experimental import pallas as pl
from jax.experimental.pallas import tpu as pltpu


def _round_up(x, m):
    return ((x + m - 1) // m) * m


# ----------------------------------------------------------------------------
# Pallas kernel: (tm, K) @ (K, tn) + bias -> (tm, tn); bf16 in, f32 acc, bf16 out
# ----------------------------------------------------------------------------
def _matmul_bias_kernel(x_ref, w_ref, b_ref, o_ref):
    acc = jnp.dot(x_ref[...], w_ref[...], preferred_element_type=jnp.float32)
    o_ref[...] = (acc + b_ref[...]).astype(o_ref.dtype)


def pallas_matmul_bias(x, w, b, *, tm_max=4096, tn_max=512,
                       vmem_budget_bytes=24 << 20, out_dtype=jnp.bfloat16):
    """x: (M, K) @ w: (K, N) + b: (N,) -> (M, N) in `out_dtype`.

    - No K padding: K blocks span the full (unpadded) contraction dim.
    - No M/N padding or padded copies: grid = cdiv, boundary blocks masked.
    - bf16 operands, f32 accumulation, f32 bias add, bf16 store.
    - tm sized from a double-buffered VMEM budget; explicit vmem_limit_bytes.
    """
    M, K = x.shape
    N = w.shape[1]

    # Column tile: full N when it fits (a full-extent block dim is exempt from
    # the 128-multiple rule); otherwise a 128-multiple tile, boundary masked.
    tn = N if N <= tn_max else tn_max  # tn_max is a multiple of 128

    # Row tile: as large as the double-buffered VMEM budget allows.
    in_bytes = 2                                   # bf16 operands
    out_bytes = jnp.dtype(out_dtype).itemsize      # bf16 output
    fixed = 2 * (K * tn * in_bytes + tn * 4)       # weights + bias, x2 buffers
    per_row = 2 * (K * in_bytes + tn * out_bytes)  # x block + out block, x2 buffers
    tm = (vmem_budget_bytes - fixed) // per_row
    tm = int(max(256, min(tm, tm_max)))
    tm -= tm % 8
    if M <= tm:
        tm = _round_up(M, 8)

    x_bf16 = x.astype(jnp.bfloat16)
    w_bf16 = w.astype(jnp.bfloat16)
    b_f32 = b.reshape(1, N).astype(jnp.float32)

    grid = (pl.cdiv(M, tm), pl.cdiv(N, tn))

    footprint = fixed + per_row * tm
    vmem_limit = int(min(max(footprint * 3 // 2, 32 << 20), 48 << 20))

    cost = pl.CostEstimate(
        flops=2 * M * K * N,
        transcendentals=0,
        bytes_accessed=(M * K * in_bytes + K * N * in_bytes
                        + N * 4 + M * N * out_bytes),
    )

    return pl.pallas_call(
        _matmul_bias_kernel,
        out_shape=jax.ShapeDtypeStruct((M, N), out_dtype),
        grid=grid,
        in_specs=[
            pl.BlockSpec((tm, K), lambda i, j: (i, 0)),
            pl.BlockSpec((K, tn), lambda i, j: (0, j)),
            pl.BlockSpec((1, tn), lambda i, j: (0, j)),
        ],
        out_specs=pl.BlockSpec((tm, tn), lambda i, j: (i, j)),
        compiler_params=pltpu.CompilerParams(
            dimension_semantics=("parallel", "parallel"),
            vmem_limit_bytes=vmem_limit),
        cost_estimate=cost,
    )(x_bf16, w_bf16, b_f32)


# ----------------------------------------------------------------------------
# PatchEmbed forward: Conv2d(in_chans, embed_dim, k=patch_size, stride, pad)
# lowered to channels-last im2col + Pallas matmul; norm_layer=None -> Identity.
# ----------------------------------------------------------------------------
def patch_embed_forward(x_nchw, conv_w, conv_b, *, stride, padding,
                        channels_last_output=False):
    """x: (B, Cin, H, W); conv_w: (Cout, Cin, kh, kw) torch layout; conv_b: (Cout,)."""
    Cout, Cin, kh, kw = conv_w.shape
    # Channels-last + bf16 BEFORE im2col: the cheap transpose happens on the
    # raw image, all glue copies are half-width, and the im2col result needs
    # no transpose (tokens is a free reshape).
    x_nhwc = jnp.transpose(x_nchw, (0, 2, 3, 1)).astype(jnp.bfloat16)
    patches = lax.conv_general_dilated_patches(
        x_nhwc,
        filter_shape=(kh, kw),
        window_strides=(stride, stride),
        padding=[(padding, padding), (padding, padding)],
        dimension_numbers=("NHWC", "HWIO", "NHWC"),
    )  # (B, Ho, Wo, Cin*kh*kw); feature order (Cin, kh, kw) matches OIHW flatten
    B, Ho, Wo, K = patches.shape
    tokens = patches.reshape(B * Ho * Wo, K)              # free reshape (C-last)
    w_flat = conv_w.reshape(Cout, K).T                    # (K, Cout)
    out = pallas_matmul_bias(tokens, w_flat, conv_b)      # (M, Cout) bf16
    out = out.reshape(B, Ho, Wo, Cout)
    # norm_layer=None -> Identity (no norm kernel).
    if channels_last_output:
        return out                                        # NHWC (TPU-preferred)
    return jnp.transpose(out, (0, 3, 1, 2))               # NCHW to match torch module


# ----------------------------------------------------------------------------
if __name__ == "__main__":
    key = jax.random.PRNGKey(0)
    kx, kw, kb = jax.random.split(key, 3)

    # Small config consistent with the module:
    # PatchEmbed(patch_size=4, stride=4, padding=0, in_chans=3, embed_dim=32)
    B, Cin, H, W = 2, 3, 16, 16
    patch_size, stride, padding = 4, 4, 0
    embed_dim = 32

    x = jax.random.normal(kx, (B, Cin, H, W), jnp.float32)
    conv_w = jax.random.normal(
        kw, (embed_dim, Cin, patch_size, patch_size), jnp.float32) * 0.02
    conv_b = jax.random.normal(kb, (embed_dim,), jnp.float32) * 0.02

    out = patch_embed_forward(x, conv_w, conv_b, stride=stride, padding=padding)
    out = jax.block_until_ready(out)

    Ho = (H + 2 * padding - patch_size) // stride + 1
    Wo = (W + 2 * padding - patch_size) // stride + 1
    assert out.shape == (B, embed_dim, Ho, Wo), out.shape
    out_f32 = out.astype(jnp.float32)
    assert bool(jnp.all(jnp.isfinite(out_f32)))

    # Reference conv in f32 (loose tolerance: bf16 MXU operands + bf16 output).
    ref = lax.conv_general_dilated(
        x, conv_w, (stride, stride), [(padding, padding)] * 2,
        dimension_numbers=("NCHW", "OIHW", "NCHW"),
    ) + conv_b[None, :, None, None]
    rel_err = jnp.max(jnp.abs(out_f32 - ref)) / (jnp.max(jnp.abs(ref)) + 1e-6)
    assert float(rel_err) < 2e-2, float(rel_err)

    print("KERNEL_OK")
</pallas_src>

<mosaic_0001>
module attributes {stable_mosaic.version = 11 : i64} {
  func.func @_matmul_bias_kernel(%arg0: i32, %arg1: i32, %arg2: memref<32x48xbf16, #tpu.memory_space<vmem>>, %arg3: memref<48x32xbf16, #tpu.memory_space<vmem>>, %arg4: memref<1x32xf32, #tpu.memory_space<vmem>>, %arg5: memref<32x32xbf16, #tpu.memory_space<vmem>>) attributes {dimension_semantics = [#tpu.dimension_semantics<parallel>, #tpu.dimension_semantics<parallel>], iteration_bounds = array<i64: 1, 1>, scalar_prefetch = 0 : i64, scratch_operands = 0 : i64, tpu.core_type = #tpu.core_type<tc>, window_params = [{transform_indices = @transform_0, window_bounds = array<i64: 32, 48>}, {transform_indices = @transform_1, window_bounds = array<i64: 48, 32>}, {transform_indices = @transform_2, window_bounds = array<i64: 1, 32>}, {transform_indices = @transform_3, window_bounds = array<i64: 32, 32>}]} {
    %c0 = arith.constant 0 : index
    %c0_0 = arith.constant 0 : index
    %0 = vector.load %arg2[%c0, %c0_0] : memref<32x48xbf16, #tpu.memory_space<vmem>>, vector<32x48xbf16>
    %c0_1 = arith.constant 0 : index
    %c0_2 = arith.constant 0 : index
    %1 = vector.load %arg3[%c0_1, %c0_2] : memref<48x32xbf16, #tpu.memory_space<vmem>>, vector<48x32xbf16>
    %cst = arith.constant dense<0.000000e+00> : vector<32x32xf32>
    %2 = tpu.matmul %0, %1, %cst {dimension_numbers = #tpu.dot_dimension_numbers<[1], [0], [0], [1], [0, 0, 1, 1], [], []>} : vector<32x48xbf16>, vector<48x32xbf16>, vector<32x32xf32> -> vector<32x32xf32>
    %c0_3 = arith.constant 0 : index
    %c0_4 = arith.constant 0 : index
    %3 = vector.load %arg4[%c0_3, %c0_4] : memref<1x32xf32, #tpu.memory_space<vmem>>, vector<1x32xf32>
    %4 = vector.broadcast %3 : vector<1x32xf32> to vector<32x32xf32>
    %5 = arith.addf %2, %4 : vector<32x32xf32>
    %6 = arith.truncf %5 : vector<32x32xf32> to vector<32x32xbf16>
    %c0_5 = arith.constant 0 : index
    %c0_6 = arith.constant 0 : index
    %7 = vector.load %arg5[%c0_5, %c0_6] : memref<32x32xbf16, #tpu.memory_space<vmem>>, vector<32x32xbf16>
    tpu.vector_store %arg5[%c0_5, %c0_6], %6 {strides = array<i32>} : memref<32x32xbf16, #tpu.memory_space<vmem>>, vector<32x32xbf16>,
    return
  }
  func.func @transform_0(%arg0: i32, %arg1: i32) -> (i32, i32) {
    %c0_i32 = arith.constant 0 : i32
    %c0_i32_0 = arith.constant 0 : i32
    return %arg0, %c0_i32 : i32, i32
  }
  func.func @transform_1(%arg0: i32, %arg1: i32) -> (i32, i32) {
    %c0_i32 = arith.constant 0 : i32
    %c0_i32_0 = arith.constant 0 : i32
    return %c0_i32, %arg1 : i32, i32
  }
  func.func @transform_2(%arg0: i32, %arg1: i32) -> (i32, i32) {
    %c0_i32 = arith.constant 0 : i32
    %c0_i32_0 = arith.constant 0 : i32
    return %c0_i32, %arg1 : i32, i32
  }
  func.func @transform_3(%arg0: i32, %arg1: i32) -> (i32, i32) {
    %c0_i32 = arith.constant 0 : i32
    return %arg0, %arg1 : i32, i32
  }
}

</mosaic_0001>

<llo_original>
// kernel: tpu_custom_call.1
$region0: #{tpu_custom_call.1}
  #allocation0 [shape = 'u32[]', space=smem, size = 0x4, offset = 0x4, fixed_abs, tag = 'smem constant byte address 0x4 - core index']
  #allocation1 [shape = 'u32[144,128]{1,0:T(1,128)}', space=vmem, size = 0x12000, scoped, tag = 'internal scratch']
  %s0 = inlined_call_operand.vmem [shape: bf16[32,48], index: 0, kind: input, shape index: {}]
  %s1 = inlined_call_operand.vmem [shape: bf16[48,32], index: 1, kind: input, shape index: {}]
  %s2 = inlined_call_operand.vmem [shape: f32[1,32], index: 2, kind: input, shape index: {}]
  %s3 = inlined_call_operand.hbm [shape: bf16[32,32], index: 3, kind: output, shape index: {}]
  %s4 = sld [smem:[#allocation0]]
  $region22: #{tpu_custom_call.1} parent=0
    _
  %s6 = ssub.s32 1, %s4
  %s7 = scalar_select 0, %s6, %s4
  $region1: #{tpu_custom_call.1} parent=0
    #allocation2 [shape = 'u8[8192]{0}', space=vmem, size = 0x2000, scoped, tag = 'output window, operand 0, single buffered']
    #allocation3 [shape = 's32[1]{0}', space=sflag, size = 0x4, scoped, tag = 'scoped memory for tpu_custom_call.1']
    %8 = vsyncpa [#allocation3], 0
    // Predicated region
    $region2: #{tpu_custom_call.1} parent=1 // pred_check
      _
    $region3: #{tpu_custom_call.1} parent=1 // pred_check_branch
      %10 = sbr.rel (0) target = $region5
    $region4: #{tpu_custom_call.1} parent=1 // pred_region
      _
    $region5: #{tpu_custom_call.1} parent=1 // pred_fallthru
      _
    // Predicated region
    $region6: #{tpu_custom_call.1} parent=1 // pred_check
      _
    $region7: #{tpu_custom_call.1} parent=1 // pred_check_branch
      %12 = sbr.rel (0) target = $region9
    $region8: #{tpu_custom_call.1} parent=1 // pred_region
      _
    $region9: #{tpu_custom_call.1} parent=1 // pred_fallthru
      _
    // Predicated region
    $region10: #{tpu_custom_call.1} parent=1 // pred_check
      _
    $region11: #{tpu_custom_call.1} parent=1 // pred_check_branch
      %14 = sbr.rel (0) target = $region13
    $region12: #{tpu_custom_call.1} parent=1 // pred_region
      _
    $region13: #{tpu_custom_call.1} parent=1 // pred_fallthru
      _
    %v16 = vld [vmem:[%s0] sm:$0xf]
    %v17 = vld [vmem:[%s0 + $0x4] sm:$0xf]
    %v18 = vld [vmem:[%s0 + $0x8] sm:$0xf]
    %v19 = vld [vmem:[%s0 + $0xc] sm:$0xf]
    %v20 = vld [vmem:[%s1] sm:$0xf]
    %v21 = vld [vmem:[%s1 + $0x4] sm:$0xf]
    %v22 = vld [vmem:[%s1 + $0x8] sm:$0xf]
    %v23 = vld [vmem:[%s1 + $0xc] sm:$0xf]
    %v24 = vld [vmem:[%s1 + $0x10] sm:$0xf]
    %v25 = vld [vmem:[%s1 + $0x14] sm:$0xf]
    %v26 = vld [vmem:[%s2] sm:$0x1]
    %v28 = vlaneseq
    %v29 = vshrl.u32 %v28, 7
    %v30 = vsub.s32 0, %v29
    %v31 = vrot.slane %v26, %v30
    %v37 = vunpack.c.l.b16 %v16
    %v38 = vunpack.c.l.b16 %v17
    %v39 = vunpack.c.l.b16 %v18
    %v40 = vunpack.c.l.b16 %v19
    %v41 = vpack.c.b16 %v38, %v37
    %v42 = vpack.c.b16 %v40, %v39
    %v49 = vunpack.c.l.b16 %v20
    %v50 = vunpack.c.l.b16 %v21
    %v51 = vunpack.c.l.b16 %v22
    %v52 = vunpack.c.l.b16 %v23
    %v53 = vunpack.c.l.b16 %v24
    %v54 = vunpack.c.l.b16 %v25
    %v55 = vpack.c.b16 %v50, %v49
    %v56 = vpack.c.b16 %v52, %v51
    %v57 = vpack.c.b16 %v54, %v53
    %vm61 = vcmask 392192
    %v63 = vsel %vm61, %v41, 0
    %v66 = vsel %vm61, %v42, 0
    %68 = vmatprep.subr.bf16.mxu0 0
    %69 = vmatpush1.bf16.msra.mxu0 0
    %70 = vmatprep.subr.bf16.mxu0 0
    %71 = vmatpush1.bf16.msra.mxu0 0
    %72 = vmatprep.subr.bf16.mxu0 0
    %73 = vmatpush1.bf16.msra.mxu0 0
    %74 = vmatprep.subr.bf16.mxu0 0
    %75 = vmatpush1.bf16.msra.mxu0 0
    %76 = vmatprep.subr.bf16.mxu0 0
    %77 = vmatpush1.bf16.msra.mxu0 0
    %78 = vmatprep.subr.bf16.mxu0 0
    %79 = vmatpush1.bf16.msra.mxu0 %v57
    %80 = vmatprep.subr.bf16.mxu0 0
    %81 = vmatpush1.bf16.msra.mxu0 %v56
    %82 = vmatprep.subr.bf16.mxu0 0
    %83 = vmatpush1.bf16.msra.mxu0 %v55
    %84 = vmatprep.subr.bf16.mxu0 0
    %85 = vmatpush2.bf16.msra.mxu0 0
    %86 = vmatprep.subr.bf16.mxu0 0
    %87 = vmatpush2.bf16.msra.mxu0 0
    %88 = vmatprep.subr.bf16.mxu0 0
    %89 = vmatpush2.bf16.msra.mxu0 0
    %90 = vmatprep.subr.bf16.mxu0 0
    %91 = vmatpush2.bf16.msra.mxu0 0
    %92 = vmatprep.subr.bf16.mxu0 0
    %93 = vmatpush2.bf16.msra.mxu0 0
    %94 = vmatprep.subr.bf16.mxu0 0
    %95 = vmatpush2.bf16.msra.mxu0 0
    %96 = vmatprep.subr.bf16.mxu0 0
    %97 = vmatpush2.bf16.msra.mxu0 0
    %98 = vmatprep.subr.bf16.mxu0 0
    %99 = vmatpush2.bf16.msra.mxu0 0
    %100 = vmatprep.mubr.bf16.mxu0 0
    %101 = vmatmul.mubr.bf16.gmra.mxu0 %v63
    %v102 = vpop.f32.mrf.mxu0
    %v103 = vadd.f32 %v31, %v102
    %v104 = vpop.f32.mrf.mxu0
    %v105 = vpop.f32.mrf.mxu0
    %v106 = vadd.f32 %v31, %v105
    %v107 = vpop.f32.mrf.mxu0
    %108 = vmatprep.mubr.bf16.mxu0 0
    %109 = vmatmul.mubr.bf16.gmra.mxu0 %v66
    %v110 = vpop.f32.mrf.mxu0
    %v111 = vadd.f32 %v31, %v110
    %v112 = vpop.f32.mrf.mxu0
    %v113 = vpop.f32.mrf.mxu0
    %v114 = vadd.f32 %v31, %v113
    %v115 = vpop.f32.mrf.mxu0
    %116 = vdwg.mxu0
    %v117 = vpack.c.bf16 %v106, %v103
    %v118 = vpack.c.bf16 %v114, %v111
    %v121 = vunpack.c.l.b16 %v117
    %v122 = vunpack.c.h.b16 %v117
    %v123 = vunpack.c.l.b16 %v118
    %v124 = vunpack.c.h.b16 %v118
    %v125 = vpack.c.b16 %v121, %v121
    %v126 = vpack.c.b16 %v122, %v122
    %v127 = vpack.c.b16 %v123, %v123
    %v128 = vpack.c.b16 %v124, %v124
    %vm133 = vcmask 257024
    %134 = vst.msk [vmem:[#allocation2] sm:$0xf] %vm133, %v125
    %135 = vst.msk [vmem:[#allocation2 + $0x4] sm:$0xf] %vm133, %v126
    %136 = vst.msk [vmem:[#allocation2 + $0x8] sm:$0xf] %vm133, %v127
    %137 = vst.msk [vmem:[#allocation2 + $0xc] sm:$0xf] %vm133, %v128
    // Predicated region
    $region14: #{tpu_custom_call.1} parent=1 // pred_check
      _
    $region15: #{tpu_custom_call.1} parent=1 // pred_check_branch
      %139 = sbr.rel (0) target = $region17
    $region16: #{tpu_custom_call.1} parent=1 // pred_region
      %s141 = ssub.s32 256, 256
      %142 = vsyncadd [#allocation3], %s141
      %s143 = sshll.u32 [#allocation2], 4
      %s144 = int_to_ptr.vmem [resolvable:$true] %s143
      %149 = dma.vmem_to_hbm [thread:$0]  %s144, 256, %s3, [#allocation3], 64, 64, 4
    $region17: #{tpu_custom_call.1} parent=1 // pred_fallthru
      _
    // Predicated region
    $region18: #{tpu_custom_call.1} parent=1 // pred_check
      _
    $region19: #{tpu_custom_call.1} parent=1 // pred_check_branch
      %151 = sbr.rel (0) target = $region21
    $region20: #{tpu_custom_call.1} parent=1 // pred_region
      %152 = dma.done [#allocation3], 256
    $region21: #{tpu_custom_call.1} parent=1 // pred_fallthru
      _
    %153 = vsyncpa [#allocation3], 1

</llo_original>
